<compile_context>
chip_gen: v5e
topology: v5e:2x2
jax: 0.10.0
libtpu: 0.0.40
codegen_flags: <defaults>
</compile_context>

<pallas_src>
import math

import jax
import jax.numpy as jnp
from jax.experimental import pallas as pl
from jax.experimental.pallas import tpu as pltpu


def B(rho):
    return 0.0 if rho == 1 else (math.sqrt(1 - (rho - 1) ** 2) - 1) / (rho - 1)


def _round_up(n, m):
    return ((n + m - 1) // m) * m


# -----------------------------------------------------------------------------
# Kernel
# -----------------------------------------------------------------------------
def make_mlp_kernel(b_slope, scale, compute_dtype):
    """Fused Linear -> ABReLU -> Linear -> ABReLU -> Linear(readout) kernel.

    `b_slope` and `scale` are Python floats baked in at trace time.
    """
    b_slope = float(b_slope)
    s = float(scale)
    n_linear = 3
    # ABReLU(s*z) == s * ABReLU(z) for s >= 0 (and bias=False), so the scale can be
    # applied once to the final (smallest) tensor instead of once per layer.
    homogeneous = s >= 0.0

    def abrelu(h):
        if b_slope == 0.0:                       # rho == 1 -> plain ReLU
            return jnp.maximum(h, 0.0)
        return jnp.where(h > 0.0, h, b_slope * h)

    def lin(h, w_ref):
        out = jnp.dot(h, w_ref[...], preferred_element_type=jnp.float32)
        if (not homogeneous) and s != 1.0:
            out = s * out                        # per-layer scaling (s < 0 path)
        return out

    def kernel(x_ref, w1_ref, w2_ref, wr_ref, o_ref):
        # In-kernel cast: no separate wrapper-side astype pass over x in HBM.
        x = x_ref[...].astype(compute_dtype)
        h = abrelu(lin(x, w1_ref))
        h = abrelu(lin(h.astype(compute_dtype), w2_ref))
        y = lin(h.astype(compute_dtype), wr_ref)
        if homogeneous and s != 1.0:
            y = (s ** n_linear) * y              # one scale on the smallest tensor
        o_ref[...] = y.astype(o_ref.dtype)

    return kernel


# -----------------------------------------------------------------------------
# One-time weight preparation (do NOT call per forward)
# -----------------------------------------------------------------------------
def prepare_weights(w1, w2, wr, compute_dtype=jnp.bfloat16):
    """Transpose PyTorch (out, in) weights to (in, out) and cast to compute dtype."""
    return (w1.T.astype(compute_dtype),         # (inp_dim, h1)
            w2.T.astype(compute_dtype),         # (h1, h2)
            wr.T.astype(compute_dtype))         # (h2, outp_dim)


# -----------------------------------------------------------------------------
# Batch-tiling policy
# -----------------------------------------------------------------------------
def _choose_batch_tiling(batch, inp_dim, h1, h2, outp_dim,
                         x_itemsize, out_itemsize, compute_itemsize):
    batch8 = _round_up(batch, 8)
    # Per-row VMEM working set: double-buffered x/out tiles + f32 intermediates +
    # compute-dtype copies fed into the next matmul.
    bytes_per_row = (inp_dim * x_itemsize * 2
                     + outp_dim * out_itemsize * 2
                     + inp_dim * compute_itemsize
                     + (h1 + h2) * 4
                     + (h1 + h2) * compute_itemsize)
    VMEM_TILE_BUDGET = 12 * 1024 * 1024          # conservative per-step budget
    tb_cap = (VMEM_TILE_BUDGET // bytes_per_row) // 8 * 8
    tb_cap = max(8, min(tb_cap, 4096))

    n_steps = pl.cdiv(batch8, tb_cap)
    # v7x: give the "parallel" batch axis >=2 balanced steps so both TensorCores get
    # work (measured neutral on single-TC v5e/v6e). Only split when halves stay large.
    if n_steps == 1 and batch8 >= 512:
        n_steps = 2
    if n_steps > 1 and n_steps % 2 == 1:
        n_steps += 1

    tb = _round_up(pl.cdiv(batch8, n_steps), 8)
    batch_pad = n_steps * tb                     # pads only to the 8-aligned tiling
    return tb, n_steps, batch_pad, bytes_per_row


# -----------------------------------------------------------------------------
# Forward
# -----------------------------------------------------------------------------
def mt_densenet2_forward(x, prepared_weights, weight_scaling, task, rho=1,
                         compute_dtype=jnp.bfloat16):
    """Pallas forward.  x: (batch, inp_dim); prepared_weights from prepare_weights()."""
    w1_t, w2_t, wr_t = prepared_weights
    batch, inp_dim = x.shape
    h1 = w1_t.shape[1]
    h2 = w2_t.shape[1]
    outp_dim = wr_t.shape[1]
    out_dtype = x.dtype
    # NOTE: `task` must be a concrete Python int and weight_scaling[task] a concrete
    # scalar (they are baked into the kernel at trace time).
    s = float(weight_scaling[task])

    tb, n_steps, batch_pad, bytes_per_row = _choose_batch_tiling(
        batch, inp_dim, h1, h2, outp_dim,
        jnp.dtype(x.dtype).itemsize, jnp.dtype(out_dtype).itemsize,
        jnp.dtype(compute_dtype).itemsize)

    x_in = x
    if batch_pad != batch:
        # bias=False and ABReLU(0)=0, so padded rows compute zeros and are sliced away.
        x_in = jnp.pad(x, ((0, batch_pad - batch), (0, 0)))

    weight_bytes = ((inp_dim * h1 + h1 * h2 + h2 * outp_dim)
                    * jnp.dtype(compute_dtype).itemsize * 2)
    vmem_needed = tb * bytes_per_row + weight_bytes
    vmem_limit = int(min(max(2 * vmem_needed, 16 * 1024 * 1024), 32 * 1024 * 1024))

    kernel = make_mlp_kernel(B(rho), s, compute_dtype)

    out = pl.pallas_call(
        kernel,
        out_shape=jax.ShapeDtypeStruct((batch_pad, outp_dim), out_dtype),
        grid_spec=pltpu.PrefetchScalarGridSpec(
            num_scalar_prefetch=0,
            grid=(n_steps,),
            in_specs=[
                pl.BlockSpec((tb, inp_dim), lambda i: (i, 0)),   # x batch tile
                pl.BlockSpec((inp_dim, h1), lambda i: (0, 0)),   # W1^T (VMEM-resident)
                pl.BlockSpec((h1, h2), lambda i: (0, 0)),        # W2^T (VMEM-resident)
                pl.BlockSpec((h2, outp_dim), lambda i: (0, 0)),  # Wr^T (VMEM-resident)
            ],
            out_specs=pl.BlockSpec((tb, outp_dim), lambda i: (i, 0)),
        ),
        compiler_params=pltpu.CompilerParams(
            dimension_semantics=("parallel",),
            vmem_limit_bytes=vmem_limit),
    )(x_in, w1_t, w2_t, wr_t)

    if batch_pad != batch:
        out = out[:batch]
    return out


def mt_densenet2_forward_all_tasks(x, prepared_weights, weight_scaling, rho=1,
                                   compute_dtype=jnp.bfloat16):
    """Fused multi-task forward: ONE kernel call for the shared backbone + readout,
    then per-task s_t**3 scaling of the tiny output.  Valid because bias=False and
    ABReLU is positively homogeneous; requires all weight_scaling >= 0.
    Returns (num_tasks, batch, outp_dim)."""
    assert all(float(s) >= 0.0 for s in weight_scaling), \
        "fused multi-task path needs non-negative scalings"
    base = mt_densenet2_forward(x, prepared_weights, [1.0], 0, rho=rho,
                                compute_dtype=compute_dtype)
    scales = jnp.asarray([float(s) ** 3 for s in weight_scaling], dtype=base.dtype)
    return base[None, :, :] * scales[:, None, None]


# -----------------------------------------------------------------------------
# Pure-JAX reference (mirrors the PyTorch forward)
# -----------------------------------------------------------------------------
def reference_forward(x, w1, w2, wr, weight_scaling, task, rho=1,
                      compute_dtype=jnp.float32):
    b = B(rho)
    s = weight_scaling[task]
    dt = compute_dtype

    def abrelu(h):
        return b * jnp.minimum(h, 0.0) + jnp.maximum(h, 0.0)

    def lin(h, w):
        return jnp.dot(h.astype(dt), (s * w).T.astype(dt),
                       preferred_element_type=jnp.float32)

    h = abrelu(lin(x, w1))
    h = abrelu(lin(h, w2))
    return lin(h, wr)


if __name__ == "__main__":
    # Module hyper-parameters (consistent with the PyTorch __init__).
    inp_dim, hdims, outp_dim = 32, [64, 64], 4
    rho = 1
    scaling = 1.0
    weight_scaling = [1.0, 0.5, 2.0, 1.5]   # one scalar per task / output
    task = 2
    batch = 8

    b = B(rho)
    key = jax.random.PRNGKey(0)
    k_x, k1, k2, kr = jax.random.split(key, 4)

    # nn.init.normal_(weight, std=scaling*sqrt(2/((B(rho)-1)^2 * fan_in)))
    std1 = scaling * math.sqrt(2.0 / ((b - 1.0) ** 2 * inp_dim))
    std2 = scaling * math.sqrt(2.0 / ((b - 1.0) ** 2 * hdims[0]))
    stdr = scaling * math.sqrt(2.0 / ((b - 1.0) ** 2 * hdims[-1]))

    w1 = jax.random.normal(k1, (hdims[0], inp_dim), dtype=jnp.float32) * std1
    w2 = jax.random.normal(k2, (hdims[1], hdims[0]), dtype=jnp.float32) * std2
    wr = jax.random.normal(kr, (outp_dim, hdims[1]), dtype=jnp.float32) * stdr
    # bias=False in the reference config -> no bias terms.
    # TODO(synk): bias=True path (and the tanh nonlinearity option) not implemented.

    x = jax.random.normal(k_x, (batch, inp_dim), dtype=jnp.float32)

    # One-time weight prep (hoisted out of the forward path).
    prep_f32 = prepare_weights(w1, w2, wr, compute_dtype=jnp.float32)
    prep_bf16 = prepare_weights(w1, w2, wr, compute_dtype=jnp.bfloat16)

    # 1) fp32 path: exact-semantics check against the pure-JAX reference.
    out_f32 = mt_densenet2_forward(x, prep_f32, weight_scaling, task,
                                   rho=rho, compute_dtype=jnp.float32)
    out_f32 = jax.block_until_ready(out_f32)
    ref_f32 = reference_forward(x, w1, w2, wr, weight_scaling, task, rho=rho)
    assert out_f32.shape == (batch, outp_dim)
    assert jnp.allclose(out_f32, ref_f32, atol=1e-5, rtol=1e-5), (
        f"fp32 max abs err {jnp.max(jnp.abs(out_f32 - ref_f32))}")

    # 2) bf16 fast path (native MXU), checked against a reference with the same casts.
    out_bf = mt_densenet2_forward(x, prep_bf16, weight_scaling, task,
                                  rho=rho, compute_dtype=jnp.bfloat16)
    out_bf = jax.block_until_ready(out_bf)
    ref_bf = reference_forward(x, w1, w2, wr, weight_scaling, task, rho=rho,
                               compute_dtype=jnp.bfloat16)
    assert jnp.allclose(out_bf, ref_bf, atol=2e-2, rtol=2e-2), (
        f"bf16 max abs err {jnp.max(jnp.abs(out_bf - ref_bf))}")

    # 3) Larger, ragged batch: exercises the balanced multi-step "parallel" grid
    #    (tb divides the 8-aligned batch exactly -> no wasted rows) and the
    #    VMEM-resident weights across steps.
    big_batch = 1200
    xb = jax.random.normal(jax.random.PRNGKey(1), (big_batch, inp_dim),
                           dtype=jnp.float32)
    out_big = mt_densenet2_forward(xb, prep_bf16, weight_scaling, task,
                                   rho=rho, compute_dtype=jnp.bfloat16)
    out_big = jax.block_until_ready(out_big)
    ref_big = reference_forward(xb, w1, w2, wr, weight_scaling, task, rho=rho,
                                compute_dtype=jnp.bfloat16)
    assert out_big.shape == (big_batch, outp_dim)
    assert jnp.allclose(out_big, ref_big, atol=2e-2, rtol=2e-2), (
        f"big-batch bf16 max abs err {jnp.max(jnp.abs(out_big - ref_big))}")

    # 4) Fused multi-task path: one kernel call for all tasks, compared per task.
    out_all = mt_densenet2_forward_all_tasks(x, prep_bf16, weight_scaling, rho=rho,
                                             compute_dtype=jnp.bfloat16)
    out_all = jax.block_until_ready(out_all)
    assert out_all.shape == (len(weight_scaling), batch, outp_dim)
    for t in range(len(weight_scaling)):
        ref_t = reference_forward(x, w1, w2, wr, weight_scaling, t, rho=rho,
                                  compute_dtype=jnp.bfloat16)
        assert jnp.allclose(out_all[t], ref_t, atol=2e-2, rtol=2e-2), (
            f"multi-task t={t} max abs err {jnp.max(jnp.abs(out_all[t] - ref_t))}")

    print("KERNEL_OK")
</pallas_src>

<mosaic_0001>
module attributes {stable_mosaic.version = 11 : i64} {
  func.func @kernel(%arg0: i32, %arg1: memref<8x32xf32, #tpu.memory_space<vmem>>, %arg2: memref<32x64xf32, #tpu.memory_space<vmem>>, %arg3: memref<64x64xf32, #tpu.memory_space<vmem>>, %arg4: memref<64x4xf32, #tpu.memory_space<vmem>>, %arg5: memref<8x4xf32, #tpu.memory_space<vmem>>) attributes {dimension_semantics = [#tpu.dimension_semantics<parallel>], iteration_bounds = array<i64: 1>, scalar_prefetch = 0 : i64, scratch_operands = 0 : i64, tpu.core_type = #tpu.core_type<tc>, window_params = [{transform_indices = @transform_0, window_bounds = array<i64: 8, 32>}, {pipeline_mode = #tpu.pipeline_mode<synchronous>, transform_indices = @transform_1, window_bounds = array<i64: 32, 64>}, {pipeline_mode = #tpu.pipeline_mode<synchronous>, transform_indices = @transform_2, window_bounds = array<i64: 64, 64>}, {pipeline_mode = #tpu.pipeline_mode<synchronous>, transform_indices = @transform_3, window_bounds = array<i64: 64, 4>}, {transform_indices = @transform_4, window_bounds = array<i64: 8, 4>}]} {
    %c0 = arith.constant 0 : index
    %c0_0 = arith.constant 0 : index
    %0 = vector.load %arg1[%c0, %c0_0] : memref<8x32xf32, #tpu.memory_space<vmem>>, vector<8x32xf32>
    %c0_1 = arith.constant 0 : index
    %c0_2 = arith.constant 0 : index
    %1 = vector.load %arg2[%c0_1, %c0_2] : memref<32x64xf32, #tpu.memory_space<vmem>>, vector<32x64xf32>
    %cst = arith.constant dense<0.000000e+00> : vector<8x64xf32>
    %2 = tpu.matmul %0, %1, %cst {dimension_numbers = #tpu.dot_dimension_numbers<[1], [0], [0], [1], [0, 0, 1, 1], [], []>} : vector<8x32xf32>, vector<32x64xf32>, vector<8x64xf32> -> vector<8x64xf32>
    %cst_3 = arith.constant 0.000000e+00 : f32
    %3 = vector.broadcast %cst_3 : f32 to vector<8x64xf32>
    %4 = arith.maximumf %2, %3 : vector<8x64xf32>
    %c0_4 = arith.constant 0 : index
    %c0_5 = arith.constant 0 : index
    %5 = vector.load %arg3[%c0_4, %c0_5] : memref<64x64xf32, #tpu.memory_space<vmem>>, vector<64x64xf32>
    %cst_6 = arith.constant dense<0.000000e+00> : vector<8x64xf32>
    %6 = tpu.matmul %4, %5, %cst_6 {dimension_numbers = #tpu.dot_dimension_numbers<[1], [0], [0], [1], [0, 0, 1, 1], [], []>} : vector<8x64xf32>, vector<64x64xf32>, vector<8x64xf32> -> vector<8x64xf32>
    %cst_7 = arith.constant 0.000000e+00 : f32
    %7 = vector.broadcast %cst_7 : f32 to vector<8x64xf32>
    %8 = arith.maximumf %6, %7 : vector<8x64xf32>
    %c0_8 = arith.constant 0 : index
    %c0_9 = arith.constant 0 : index
    %9 = vector.load %arg4[%c0_8, %c0_9] : memref<64x4xf32, #tpu.memory_space<vmem>>, vector<64x4xf32>
    %cst_10 = arith.constant dense<0.000000e+00> : vector<8x4xf32>
    %10 = tpu.matmul %8, %9, %cst_10 {dimension_numbers = #tpu.dot_dimension_numbers<[1], [0], [0], [1], [0, 0, 1, 1], [], []>} : vector<8x64xf32>, vector<64x4xf32>, vector<8x4xf32> -> vector<8x4xf32>
    %cst_11 = arith.constant 8.000000e+00 : f32
    %11 = vector.broadcast %cst_11 : f32 to vector<8x4xf32>
    %12 = arith.mulf %11, %10 : vector<8x4xf32>
    %c0_12 = arith.constant 0 : index
    %c0_13 = arith.constant 0 : index
    %13 = vector.load %arg5[%c0_12, %c0_13] : memref<8x4xf32, #tpu.memory_space<vmem>>, vector<8x4xf32>
    tpu.vector_store %arg5[%c0_12, %c0_13], %12 {strides = array<i32>} : memref<8x4xf32, #tpu.memory_space<vmem>>, vector<8x4xf32>,
    return
  }
  func.func @transform_0(%arg0: i32) -> (i32, i32) {
    %c0_i32 = arith.constant 0 : i32
    %c0_i32_0 = arith.constant 0 : i32
    return %arg0, %c0_i32 : i32, i32
  }
  func.func @transform_1(%arg0: i32) -> (i32, i32) {
    %c0_i32 = arith.constant 0 : i32
    %c0_i32_0 = arith.constant 0 : i32
    %c0_i32_1 = arith.constant 0 : i32
    return %c0_i32, %c0_i32_0 : i32, i32
  }
  func.func @transform_2(%arg0: i32) -> (i32, i32) {
    %c0_i32 = arith.constant 0 : i32
    %c0_i32_0 = arith.constant 0 : i32
    %c0_i32_1 = arith.constant 0 : i32
    return %c0_i32, %c0_i32_0 : i32, i32
  }
  func.func @transform_3(%arg0: i32) -> (i32, i32) {
    %c0_i32 = arith.constant 0 : i32
    %c0_i32_0 = arith.constant 0 : i32
    %c0_i32_1 = arith.constant 0 : i32
    return %c0_i32, %c0_i32_0 : i32, i32
  }
  func.func @transform_4(%arg0: i32) -> (i32, i32) {
    %c0_i32 = arith.constant 0 : i32
    %c0_i32_0 = arith.constant 0 : i32
    return %arg0, %c0_i32 : i32, i32
  }
}

</mosaic_0001>

<llo_original>
// kernel: tpu_custom_call.1
$region0: #{tpu_custom_call.1}
  #allocation0 [shape = 'u32[]', space=smem, size = 0x4, offset = 0x4, fixed_abs, tag = 'smem constant byte address 0x4 - core index']
  #allocation1 [shape = 'u32[72,128]{1,0:T(1,128)}', space=vmem, size = 0x9000, scoped, tag = 'internal scratch']
  %s0 = inlined_call_operand.hbm [shape: f32[8,32], index: 0, kind: input, shape index: {}]
  %s1 = inlined_call_operand.hbm [shape: f32[32,64], index: 1, kind: input, shape index: {}]
  %s2 = inlined_call_operand.vmem [shape: f32[64,64], index: 2, kind: input, shape index: {}]
  %s3 = inlined_call_operand.vmem [shape: f32[64,4], index: 3, kind: input, shape index: {}]
  %s4 = inlined_call_operand.vmem [shape: f32[8,4], index: 4, kind: output, shape index: {}]
  %s5 = sld [smem:[#allocation0]]
  $region34: #{tpu_custom_call.1} parent=0
    _
  %s7 = ssub.s32 1, %s5
  %s8 = scalar_select 0, %s7, %s5
  $region1: #{tpu_custom_call.1} parent=0
    #allocation2 [shape = 'u8[4096]{0}', space=vmem, size = 0x1000, scoped, tag = 'input window, operand 0, single buffered']
    #allocation3 [shape = 's32[1]{0}', space=sflag, size = 0x4, scoped, tag = 'scoped memory for tpu_custom_call.1']
    #allocation4 [shape = 'u8[16384]{0}', space=vmem, size = 0x4000, scoped, tag = 'input window, operand 1, single buffered']
    #allocation5 [shape = 's32[1]{0}', space=sflag, size = 0x4, scoped, tag = 'scoped memory for tpu_custom_call.1']
    %9 = vsyncpa [#allocation3], 0
    %10 = vsyncpa [#allocation5], 0
    // Predicated region
    $region2: #{tpu_custom_call.1} parent=1 // pred_check
      _
    $region3: #{tpu_custom_call.1} parent=1 // pred_check_branch
      %12 = sbr.rel (0) target = $region5
    $region4: #{tpu_custom_call.1} parent=1 // pred_region
      %14 = vsyncadd [#allocation3], 0
      %s16 = sshll.u32 %s0, 4
      %s17 = int_to_ptr.hbm [resolvable:$true] %s16
      %s18 = sshll.u32 [#allocation2], 4
      %s19 = int_to_ptr.vmem [resolvable:$true] %s18
      %21 = dma.hbm_to_vmem [thread:$0]  %s17, 128, %s19, [#allocation3]
    $region5: #{tpu_custom_call.1} parent=1 // pred_fallthru
      _
    // Predicated region
    $region6: #{tpu_custom_call.1} parent=1 // pred_check
      _
    $region7: #{tpu_custom_call.1} parent=1 // pred_check_branch
      %23 = sbr.rel (0) target = $region9
    $region8: #{tpu_custom_call.1} parent=1 // pred_region
      %25 = vsyncadd [#allocation5], 0
      %s26 = sshll.u32 %s1, 4
      %s27 = int_to_ptr.hbm [resolvable:$true] %s26
      %s28 = sshll.u32 [#allocation4], 4
      %s29 = int_to_ptr.vmem [resolvable:$true] %s28
      %34 = dma.hbm_to_vmem [thread:$0]  %s27, 512, %s29, [#allocation5], 128, 128, 8
    $region9: #{tpu_custom_call.1} parent=1 // pred_fallthru
      _
    // Predicated region
    $region10: #{tpu_custom_call.1} parent=1 // pred_check
      _
    $region11: #{tpu_custom_call.1} parent=1 // pred_check_branch
      %36 = sbr.rel (0) target = $region13
    $region12: #{tpu_custom_call.1} parent=1 // pred_region
      _
    $region13: #{tpu_custom_call.1} parent=1 // pred_fallthru
      _
    // Predicated region
    $region14: #{tpu_custom_call.1} parent=1 // pred_check
      _
    $region15: #{tpu_custom_call.1} parent=1 // pred_check_branch
      %38 = sbr.rel (0) target = $region17
    $region16: #{tpu_custom_call.1} parent=1 // pred_region
      _
    $region17: #{tpu_custom_call.1} parent=1 // pred_fallthru
      _
    // Predicated region
    $region18: #{tpu_custom_call.1} parent=1 // pred_check
      _
    $region19: #{tpu_custom_call.1} parent=1 // pred_check_branch
      %40 = sbr.rel (0) target = $region21
    $region20: #{tpu_custom_call.1} parent=1 // pred_region
      %42 = dma.done [#allocation3], 128
    $region21: #{tpu_custom_call.1} parent=1 // pred_fallthru
      _
    // Predicated region
    $region22: #{tpu_custom_call.1} parent=1 // pred_check
      _
    $region23: #{tpu_custom_call.1} parent=1 // pred_check_branch
      %44 = sbr.rel (0) target = $region25
    $region24: #{tpu_custom_call.1} parent=1 // pred_region
      %46 = dma.done [#allocation5], 512
    $region25: #{tpu_custom_call.1} parent=1 // pred_fallthru
      _
    %v47 = vld [vmem:[#allocation2] sm:$0xff]
    %v48 = vld [vmem:[#allocation4] sm:$0xff]
    %v49 = vld [vmem:[#allocation4 + $0x8] sm:$0xff]
    %v50 = vld [vmem:[#allocation4 + $0x10] sm:$0xff]
    %v51 = vld [vmem:[#allocation4 + $0x18] sm:$0xff]
    %vm52 = vcmask 261120
    %v54 = vsel %vm52, %v47, 0
    %56 = vmatpush.msra.mxu0 0.0
    %57 = vmatpush.msra.mxu0 0.0
    %58 = vmatpush.msra.mxu0 0.0
    %59 = vmatpush.msra.mxu0 0.0
    %60 = vmatpush.msra.mxu0 0.0
    %61 = vmatpush.msra.mxu0 0.0
    %62 = vmatpush.msra.mxu0 0.0
    %63 = vmatpush.msra.mxu0 0.0
    %64 = vmatpush.msra.mxu0 0.0
    %65 = vmatpush.msra.mxu0 0.0
    %66 = vmatpush.msra.mxu0 0.0
    %67 = vmatpush.msra.mxu0 0.0
    %68 = vmatpush.msra.mxu0 %v51
    %69 = vmatpush.msra.mxu0 %v50
    %70 = vmatpush.msra.mxu0 %v49
    %71 = vmatpush.msra.mxu0 %v48
    %72 = vmatmul.f32.gmra.mxu0 %v54
    %v73 = vpop.f32.mrf.mxu0
    %v74 = vadd.f32 0.0, %v73
    %75 = vdwg.mxu0
    %v76 = vmax.f32 %v74, 0.0
    %v77 = vld [vmem:[%s2] sm:$0xff]
    %v78 = vld [vmem:[%s2 + $0x8] sm:$0xff]
    %v79 = vld [vmem:[%s2 + $0x10] sm:$0xff]
    %v80 = vld [vmem:[%s2 + $0x18] sm:$0xff]
    %v81 = vld [vmem:[%s2 + $0x20] sm:$0xff]
    %v82 = vld [vmem:[%s2 + $0x28] sm:$0xff]
    %v83 = vld [vmem:[%s2 + $0x30] sm:$0xff]
    %v84 = vld [vmem:[%s2 + $0x38] sm:$0xff]
    %vm85 = vcmask 523264
    %v87 = vsel %vm85, %v76, 0
    %89 = vmatpush.msra.mxu0 0.0
    %90 = vmatpush.msra.mxu0 0.0
    %91 = vmatpush.msra.mxu0 0.0
    %92 = vmatpush.msra.mxu0 0.0
    %93 = vmatpush.msra.mxu0 0.0
    %94 = vmatpush.msra.mxu0 0.0
    %95 = vmatpush.msra.mxu0 0.0
    %96 = vmatpush.msra.mxu0 0.0
    %97 = vmatpush.msra.mxu0 %v84
    %98 = vmatpush.msra.mxu0 %v83
    %99 = vmatpush.msra.mxu0 %v82
    %100 = vmatpush.msra.mxu0 %v81
    %101 = vmatpush.msra.mxu0 %v80
    %102 = vmatpush.msra.mxu0 %v79
    %103 = vmatpush.msra.mxu0 %v78
    %104 = vmatpush.msra.mxu0 %v77
    %105 = vmatmul.f32.gmra.mxu0 %v87
    %v106 = vpop.f32.mrf.mxu0
    %v107 = vadd.f32 0.0, %v106
    %108 = vdwg.mxu0
    %v109 = vmax.f32 %v107, 0.0
    %v110 = vld [vmem:[%s3] sm:$0xff]
    %v111 = vld [vmem:[%s3 + $0x8] sm:$0xff]
    %v112 = vld [vmem:[%s3 + $0x10] sm:$0xff]
    %v113 = vld [vmem:[%s3 + $0x18] sm:$0xff]
    %v114 = vld [vmem:[%s3 + $0x20] sm:$0xff]
    %v115 = vld [vmem:[%s3 + $0x28] sm:$0xff]
    %v116 = vld [vmem:[%s3 + $0x30] sm:$0xff]
    %v117 = vld [vmem:[%s3 + $0x38] sm:$0xff]
    %v119 = vsel %vm85, %v109, 0
    %121 = vmatpush.msra.mxu0 0.0
    %122 = vmatpush.msra.mxu0 0.0
    %123 = vmatpush.msra.mxu0 0.0
    %124 = vmatpush.msra.mxu0 0.0
    %125 = vmatpush.msra.mxu0 0.0
    %126 = vmatpush.msra.mxu0 0.0
    %127 = vmatpush.msra.mxu0 0.0
    %128 = vmatpush.msra.mxu0 0.0
    %129 = vmatpush.msra.mxu0 %v117
    %130 = vmatpush.msra.mxu0 %v116
    %131 = vmatpush.msra.mxu0 %v115
    %132 = vmatpush.msra.mxu0 %v114
    %133 = vmatpush.msra.mxu0 %v113
    %134 = vmatpush.msra.mxu0 %v112
    %135 = vmatpush.msra.mxu0 %v111
    %136 = vmatpush.msra.mxu0 %v110
    %137 = vmatmul.f32.gmra.mxu0 %v119
    %v138 = vpop.f32.mrf.mxu0
    %v139 = vadd.f32 0.0, %v138
    %140 = vdwg.mxu0
    %v141 = vmul.f32 %v139, 8.0
    %vm142 = vcmask 31744
    %143 = vst.msk [vmem:[%s4] sm:$0xff] %vm142, %v141
    // Predicated region
    $region26: #{tpu_custom_call.1} parent=1 // pred_check
      _
    $region27: #{tpu_custom_call.1} parent=1 // pred_check_branch
      %145 = sbr.rel (0) target = $region29
    $region28: #{tpu_custom_call.1} parent=1 // pred_region
      _
    $region29: #{tpu_custom_call.1} parent=1 // pred_fallthru
      _
    // Predicated region
    $region30: #{tpu_custom_call.1} parent=1 // pred_check
      _
    $region31: #{tpu_custom_call.1} parent=1 // pred_check_branch
      %147 = sbr.rel (0) target = $region33
    $region32: #{tpu_custom_call.1} parent=1 // pred_region
      _
    $region33: #{tpu_custom_call.1} parent=1 // pred_fallthru
      _
    %148 = vsyncpa [#allocation3], 1
    %149 = vsyncpa [#allocation5], 1

</llo_original>
